<compile_context>
chip_gen: v7x
topology: tpu7x:2x2x1
jax: 0.10.0
libtpu: 0.0.40
codegen_flags: <defaults>
</compile_context>

<pallas_src>
import jax
import jax.numpy as jnp
import numpy as np
from jax.experimental import pallas as pl
from jax.experimental.pallas import tpu as pltpu


def generate_filter(start, end, size):
    """Python port of the PyTorch helper (band-pass mask in DCT space)."""
    return [
        [0.0 if i + j > end or i + j <= start else 1.0 for j in range(size)]
        for i in range(size)
    ]


def _filter_mul_kernel(filt_ref, x_ref, o_ref):
    # filt_ref: (1, TL) in x.dtype — constant row index_map, VMEM-resident.
    # x_ref / o_ref: (R, TL) — lane-dense tiles; one broadcast vmul per step.
    o_ref[...] = (x_ref[...] * filt_ref[...]).astype(o_ref.dtype)


def _round_up(v, m):
    return ((v + m - 1) // m) * m


def _sublane_multiple(dtype):
    # Packed-sublane multiple: 8 for 32-bit, 16 for 16-bit, 32 for 8-bit dtypes.
    return {4: 8, 2: 16, 1: 32}.get(jnp.dtype(dtype).itemsize, 8)


def _vmem_capacity_bytes():
    try:
        cap = int(getattr(pltpu.get_tpu_info(), "vmem_capacity_bytes"))
        if cap > 0:
            return cap
    except Exception:
        pass
    return 64 * 1024 * 1024  # conservative fallback (v7x per-TC physical VMEM)


def _choose_lane_pack(BC, HW):
    """Smallest k dividing BC such that k*HW is a multiple of 128 lanes."""
    if HW % 128 == 0:
        return 1
    for k in range(2, min(BC, 128) + 1):
        if BC % k == 0 and (k * HW) % 128 == 0:
            return k
    return 1  # no clean pack: fall back to masked tail stores (still correct)


def filter_forward(x, base, learnable=None, *, use_learnable=True, norm=False,
                   ft_num=None):
    """x: [B, C, size, size]; base/learnable: [size, size] float32."""
    B, C, H, W = x.shape
    HW = H * W
    BC = B * C
    assert base.shape == (H, W)

    itemsize = jnp.dtype(x.dtype).itemsize
    sub = _sublane_multiple(x.dtype)

    # ---- Filter construction hoisted out of the per-step kernel body: built
    #      once here in f32, norm folded in, then cast to x.dtype so the
    #      in-kernel op is a single same-dtype vmul with no per-step casts.
    base_f = base.astype(jnp.float32).reshape(1, HW)
    if use_learnable:
        filt = base_f + (2.0 * jax.nn.sigmoid(
            learnable.astype(jnp.float32).reshape(1, HW)) - 1.0)
    else:
        filt = base_f
    if norm:
        # Matches the PyTorch module (ft_num == 0 would give inf/nan there too).
        filt = filt / jnp.float32(ft_num)

    # ---- Lane-dense layout: fold `pack` consecutive (b, c) rows into one row
    #      when HW is not already a multiple of 128 lanes.
    pack = _choose_lane_pack(BC, HW)
    L = pack * HW
    rows = BC // pack
    x_flat = x.reshape(rows, L)
    if pack > 1:
        filt = jnp.tile(filt, (1, pack))
    filt = filt.astype(x.dtype)

    # ---- Generation-aware per-block budget: ~vmem/16 clamped to [2, 8] MiB
    #      (8 MiB on v5e/v6e's 128 MiB VMEM, 4 MiB on v7x's 64 MiB per TC).
    vmem_cap = _vmem_capacity_bytes()
    target_block_bytes = int(min(8 << 20, max(2 << 20, vmem_cap // 16)))

    # Lane tiling when a single (sub, L) strip would already exceed the budget
    # (large spatial sizes); lane tile stays a multiple of 128.
    if L > 128 and L * itemsize * sub > target_block_bytes:
        TL = (target_block_bytes // (sub * itemsize)) // 128 * 128
        TL = max(128, min(TL, L))
    else:
        TL = L

    # Row tiling: fill the budget, rounded to the packed-sublane multiple.
    rows_cap = max(sub, (target_block_bytes // (TL * itemsize)) // sub * sub)
    if rows <= rows_cap:
        if rows > 2 * sub:
            # Guarantee >=2 row steps so v7x's two TensorCores both stream.
            R = min(rows_cap, _round_up(pl.cdiv(rows, 2), sub))
        else:
            R = rows  # tiny problem: single full-extent block
    else:
        R = rows_cap

    grid = (pl.cdiv(rows, R), pl.cdiv(L, TL))

    # Explicit scoped-VMEM limit: 2x double-buffered x blocks + 2x out blocks
    # + filter tiles, with headroom, clamped to ~80% of physical VMEM per TC.
    block_bytes = R * TL * itemsize
    filt_block_bytes = TL * jnp.dtype(filt.dtype).itemsize
    vmem_limit = int(min(
        max(4 * block_bytes + 4 * filt_block_bytes + (8 << 20), 24 << 20),
        max(int(0.8 * vmem_cap), 24 << 20)))

    cost = pl.CostEstimate(
        flops=BC * HW,
        transcendentals=0,
        bytes_accessed=2 * BC * HW * itemsize + L * jnp.dtype(filt.dtype).itemsize,
    )

    out_flat = pl.pallas_call(
        _filter_mul_kernel,
        out_shape=jax.ShapeDtypeStruct((rows, L), x.dtype),
        grid_spec=pl.GridSpec(
            grid=grid,
            in_specs=[
                pl.BlockSpec((1, TL), lambda i, j: (0, j)),   # resident filter
                pl.BlockSpec((R, TL), lambda i, j: (i, j)),   # x tile
            ],
            out_specs=pl.BlockSpec((R, TL), lambda i, j: (i, j)),
        ),
        compiler_params=pltpu.CompilerParams(
            dimension_semantics=("parallel", "parallel"),
            vmem_limit_bytes=vmem_limit,
        ),
        cost_estimate=cost,
    )(filt, x_flat)

    return out_flat.reshape(B, C, H, W)


if __name__ == "__main__":
    # Module config (deterministic, synthetic params — no checkpoint load).
    size, band_start, band_end = 16, 0, 8
    use_learnable, norm = True, False

    base_np = np.array(generate_filter(band_start, band_end, size), dtype=np.float32)
    base = jnp.asarray(base_np)
    ft_num = float(base_np.sum())

    key = jax.random.PRNGKey(0)
    k_learn, k_x = jax.random.split(key)
    # learnable ~ N(0, 0.1) as in learnable.data.normal_(0.0, 0.1)
    learnable = 0.1 * jax.random.normal(k_learn, (size, size), dtype=jnp.float32)

    # Input: NCHW [B, C, size, size]
    x = jax.random.normal(k_x, (2, 4, size, size), dtype=jnp.float32)

    y = filter_forward(
        x, base, learnable, use_learnable=use_learnable, norm=norm, ft_num=ft_num
    )
    y = jax.block_until_ready(y)

    # Pure-JAX reference check.
    filt_ref = base + (2.0 * jax.nn.sigmoid(learnable) - 1.0)
    y_ref = x * filt_ref
    if norm:
        y_ref = y_ref / ft_num
    np.testing.assert_allclose(np.asarray(y), np.asarray(y_ref), rtol=1e-5, atol=1e-5)

    print("KERNEL_OK")
</pallas_src>

<mosaic_0001>
module attributes {stable_mosaic.version = 11 : i64} {
  func.func @_filter_mul_kernel(%arg0: i32, %arg1: i32, %arg2: memref<1x256xf32, #tpu.memory_space<vmem>>, %arg3: memref<8x256xf32, #tpu.memory_space<vmem>>, %arg4: memref<8x256xf32, #tpu.memory_space<vmem>>) attributes {dimension_semantics = [#tpu.dimension_semantics<parallel>, #tpu.dimension_semantics<parallel>], iteration_bounds = array<i64: 1, 1>, scalar_prefetch = 0 : i64, scratch_operands = 0 : i64, tpu.core_type = #tpu.core_type<tc>, window_params = [{transform_indices = @transform_0, window_bounds = array<i64: 1, 256>}, {transform_indices = @transform_1, window_bounds = array<i64: 8, 256>}, {transform_indices = @transform_2, window_bounds = array<i64: 8, 256>}]} {
    %c0 = arith.constant 0 : index
    %c0_0 = arith.constant 0 : index
    %0 = vector.load %arg3[%c0, %c0_0] : memref<8x256xf32, #tpu.memory_space<vmem>>, vector<8x256xf32>
    %c0_1 = arith.constant 0 : index
    %c0_2 = arith.constant 0 : index
    %1 = vector.load %arg2[%c0_1, %c0_2] : memref<1x256xf32, #tpu.memory_space<vmem>>, vector<1x256xf32>
    %2 = vector.broadcast %1 : vector<1x256xf32> to vector<8x256xf32>
    %3 = arith.mulf %0, %2 : vector<8x256xf32>
    %c0_3 = arith.constant 0 : index
    %c0_4 = arith.constant 0 : index
    %4 = vector.load %arg4[%c0_3, %c0_4] : memref<8x256xf32, #tpu.memory_space<vmem>>, vector<8x256xf32>
    tpu.vector_store %arg4[%c0_3, %c0_4], %3 {strides = array<i32>} : memref<8x256xf32, #tpu.memory_space<vmem>>, vector<8x256xf32>,
    return
  }
  func.func @transform_0(%arg0: i32, %arg1: i32) -> (i32, i32) {
    %c0_i32 = arith.constant 0 : i32
    %c0_i32_0 = arith.constant 0 : i32
    return %c0_i32, %arg1 : i32, i32
  }
  func.func @transform_1(%arg0: i32, %arg1: i32) -> (i32, i32) {
    %c0_i32 = arith.constant 0 : i32
    return %arg0, %arg1 : i32, i32
  }
  func.func @transform_2(%arg0: i32, %arg1: i32) -> (i32, i32) {
    %c0_i32 = arith.constant 0 : i32
    return %arg0, %arg1 : i32, i32
  }
}

</mosaic_0001>

<llo_original>
// kernel: tpu_custom_call.1
$region0: #{tpu_custom_call.1}
  #allocation0 [shape = 'u32[]', space=smem, size = 0x4, offset = 0x4, fixed_abs, tag = 'smem constant byte address 0x4 - core index']
  #allocation1 [shape = 'u32[144,128]{1,0:T(1,128)}', space=vmem, size = 0x12000, scoped, tag = 'internal scratch']
  %s0 = inlined_call_operand.hbm [shape: f32[1,256], index: 0, kind: input, shape index: {}]
  %s1 = inlined_call_operand.hbm [shape: f32[8,256], index: 1, kind: input, shape index: {}]
  %s2 = inlined_call_operand.hbm [shape: f32[8,256], index: 2, kind: output, shape index: {}]
  %s3 = sld [smem:[#allocation0]]
  $region26: #{tpu_custom_call.1} parent=0
    _
  %s5 = ssub.s32 1, %s3
  %s6 = scalar_select 0, %s5, %s3
  $region1: #{tpu_custom_call.1} parent=0
    #allocation2 [shape = 'u8[1024]{0}', space=vmem, size = 0x400, scoped, tag = 'input window, operand 0, single buffered']
    #allocation3 [shape = 's32[1]{0}', space=sflag, size = 0x4, scoped, tag = 'scoped memory for tpu_custom_call.1']
    #allocation4 [shape = 's32[1]{0}', space=sflag, size = 0x4, scoped, tag = 'scoped memory for tpu_custom_call.1']
    #allocation5 [shape = 'u8[8192]{0}', space=vmem, size = 0x2000, scoped, tag = 'input window, operand 1, single buffered']
    #allocation6 [shape = 's32[1]{0}', space=sflag, size = 0x4, scoped, tag = 'scoped memory for tpu_custom_call.1']
    #allocation7 [shape = 'u8[8192]{0}', space=vmem, size = 0x2000, scoped, tag = 'output window, operand 0, single buffered']
    %7 = vsyncpa [#allocation3], 0
    %8 = vsyncpa [#allocation6], 0
    %9 = vsyncpa [#allocation4], 0
    // Predicated region
    $region2: #{tpu_custom_call.1} parent=1 // pred_check
      _
    $region3: #{tpu_custom_call.1} parent=1 // pred_check_branch
      %11 = sbr.rel (0) target = $region5
    $region4: #{tpu_custom_call.1} parent=1 // pred_region
      %s13 = ssub.s32 32, 32
      %14 = vsyncadd [#allocation3], %s13
      %s16 = sshll.u32 [#allocation2], 4
      %s17 = int_to_ptr.vmem [resolvable:$true] %s16
      %19 = dma.hbm_to_vmem [thread:$0]  %s0, 32, %s17, [#allocation3]
    $region5: #{tpu_custom_call.1} parent=1 // pred_fallthru
      _
    // Predicated region
    $region6: #{tpu_custom_call.1} parent=1 // pred_check
      _
    $region7: #{tpu_custom_call.1} parent=1 // pred_check_branch
      %21 = sbr.rel (0) target = $region9
    $region8: #{tpu_custom_call.1} parent=1 // pred_region
      %s23 = ssub.s32 256, 256
      %24 = vsyncadd [#allocation6], %s23
      %s26 = sshll.u32 [#allocation5], 4
      %s27 = int_to_ptr.vmem [resolvable:$true] %s26
      %29 = dma.hbm_to_vmem [thread:$0]  %s1, 256, %s27, [#allocation6]
    $region9: #{tpu_custom_call.1} parent=1 // pred_fallthru
      _
    // Predicated region
    $region10: #{tpu_custom_call.1} parent=1 // pred_check
      _
    $region11: #{tpu_custom_call.1} parent=1 // pred_check_branch
      %31 = sbr.rel (0) target = $region13
    $region12: #{tpu_custom_call.1} parent=1 // pred_region
      %32 = dma.done [#allocation3], 32
    $region13: #{tpu_custom_call.1} parent=1 // pred_fallthru
      _
    // Predicated region
    $region14: #{tpu_custom_call.1} parent=1 // pred_check
      _
    $region15: #{tpu_custom_call.1} parent=1 // pred_check_branch
      %34 = sbr.rel (0) target = $region17
    $region16: #{tpu_custom_call.1} parent=1 // pred_region
      %35 = dma.done [#allocation6], 256
    $region17: #{tpu_custom_call.1} parent=1 // pred_fallthru
      _
    %v36 = vld [vmem:[#allocation5] sm:$0xff]
    %v37 = vld [vmem:[#allocation5 + $0x8] sm:$0xff]
    %v38 = vld [vmem:[#allocation2] sm:$0x3]
    %v40 = vlaneseq
    %v41 = vshrl.u32 %v40, 7
    %v42 = vsub.s32 0, %v41
    %v43 = vrot.slane %v38, %v42
    %v44 = vlaneseq
    %v45 = vshrl.u32 %v44, 7
    %v46 = vsub.s32 1, %v45
    %v47 = vrot.slane %v38, %v46
    %v50 = vmul.f32 %v36, %v43
    %v51 = vmul.f32 %v37, %v47
    %52 = vst [vmem:[#allocation7] sm:$0xff] %v50
    %53 = vst [vmem:[#allocation7 + $0x8] sm:$0xff] %v51
    // Predicated region
    $region18: #{tpu_custom_call.1} parent=1 // pred_check
      _
    $region19: #{tpu_custom_call.1} parent=1 // pred_check_branch
      %55 = sbr.rel (0) target = $region21
    $region20: #{tpu_custom_call.1} parent=1 // pred_region
      %s57 = ssub.s32 256, 256
      %58 = vsyncadd [#allocation4], %s57
      %s60 = sshll.u32 [#allocation7], 4
      %s61 = int_to_ptr.vmem [resolvable:$true] %s60
      %63 = dma.vmem_to_hbm [thread:$0]  %s61, 256, %s2, [#allocation4]
    $region21: #{tpu_custom_call.1} parent=1 // pred_fallthru
      _
    // Predicated region
    $region22: #{tpu_custom_call.1} parent=1 // pred_check
      _
    $region23: #{tpu_custom_call.1} parent=1 // pred_check_branch
      %65 = sbr.rel (0) target = $region25
    $region24: #{tpu_custom_call.1} parent=1 // pred_region
      %66 = dma.done [#allocation4], 256
    $region25: #{tpu_custom_call.1} parent=1 // pred_fallthru
      _
    %67 = vsyncpa [#allocation3], 1
    %68 = vsyncpa [#allocation6], 1
    %69 = vsyncpa [#allocation4], 1

</llo_original>
